<compile_context>
chip_gen: v5e
topology: v5e:2x2
jax: 0.10.0
libtpu: 0.0.40
codegen_flags: <defaults>
</compile_context>

<pallas_src>
import functools

import jax
import jax.numpy as jnp
from jax.experimental import pallas as pl
from jax.experimental.pallas import tpu as pltpu


def _round_up(x, m):
    return (x + m - 1) // m * m


def _head_transform_kernel(x_ref, w_ref, b_ref, g_ref, beta_ref, o_ref, *,
                           eps, hidden_real):
    # x_ref:    (TN, Hp)  tile of input rows (native dtype, e.g. bf16)
    # w_ref:    (Hp, Hp)  dense weight in PyTorch [out, in] layout (resident)
    # b_ref:    (1, Hp)   dense bias
    # g_ref:    (1, Hp)   layer-norm gamma
    # beta_ref: (1, Hp)   layer-norm beta
    # o_ref:    (TN, Hp)  output tile

    # Dense: y = x @ W^T + b. Contract on w's LAST dim (PyTorch [out, in] layout),
    # native-dtype operands straight into the MXU, f32 accumulation.
    y = jax.lax.dot_general(
        x_ref[...], w_ref[...],
        dimension_numbers=(((1,), (1,)), ((), ())),
        preferred_element_type=jnp.float32,
    )
    y = y + b_ref[...].astype(jnp.float32)

    # GELU, tanh approximation (matches nn.GELU(approximate='tanh')); f32 epilogue.
    c = jnp.float32(0.7978845608028654)  # sqrt(2/pi)
    y = jnp.float32(0.5) * y * (jnp.float32(1.0) +
                                jnp.tanh(c * (y + jnp.float32(0.044715) * y * y * y)))

    # LayerNorm over the real hidden size (padded columns are exactly zero, so the
    # sums over the padded width are unaffected). Single-pass statistics.
    inv_h = jnp.float32(1.0 / hidden_real)
    mean = jnp.sum(y, axis=-1, keepdims=True) * inv_h
    mean_sq = jnp.sum(y * y, axis=-1, keepdims=True) * inv_h
    var = mean_sq - mean * mean
    yn = (y - mean) * jax.lax.rsqrt(var + jnp.float32(eps))
    out = yn * g_ref[...].astype(jnp.float32) + beta_ref[...].astype(jnp.float32)

    o_ref[...] = out.astype(o_ref.dtype)


def bert_prediction_head_transform(x, w, b, gamma, beta, *, eps=1e-12, row_tile=256):
    """x: [batch, seq, hidden]; w: [hidden, hidden] in PyTorch Linear layout [out, in];
    b, gamma, beta: [hidden]. x and w should share a dtype (bf16 recommended on TPU)."""
    B, S, H = x.shape
    N = B * S

    # Lane-dense hidden padding (multiple of 128).
    Hp = max(_round_up(H, 128), 128)
    # Row tile: sublane-aligned (multiple of 8); small problems use a single tile.
    tile_n = _round_up(N, 8) if N < row_tile else row_tile
    Np = _round_up(N, tile_n)

    x2 = x.reshape(N, H)
    if (Np, Hp) != (N, H):
        x2 = jnp.pad(x2, ((0, Np - N), (0, Hp - H)))
    if Hp != H:
        w_p = jnp.pad(w, ((0, Hp - H), (0, Hp - H)))
        b_p = jnp.pad(b, (0, Hp - H))
        g_p = jnp.pad(gamma, (0, Hp - H))
        beta_p = jnp.pad(beta, (0, Hp - H))
    else:
        w_p, b_p, g_p, beta_p = w, b, gamma, beta

    b2 = b_p.reshape(1, Hp)
    g2 = g_p.reshape(1, Hp)
    beta2 = beta_p.reshape(1, Hp)

    # VMEM budget (sized so double-buffering survives v7x's 64 MiB VMEM).
    x_bytes = jnp.dtype(x.dtype).itemsize
    w_bytes = jnp.dtype(w.dtype).itemsize
    vmem_est = (2 * Hp * Hp * w_bytes            # resident weight (worst case 2 bufs)
                + 4 * tile_n * Hp * x_bytes      # x + out tiles, double-buffered
                + 6 * tile_n * Hp * 4            # f32 intermediates
                + (2 << 20))                     # margin
    vmem_limit = int(min(max(vmem_est, 32 * 2**20), 64 * 2**20))

    kernel = functools.partial(_head_transform_kernel, eps=eps, hidden_real=H)

    out2 = pl.pallas_call(
        kernel,
        out_shape=jax.ShapeDtypeStruct((Np, Hp), x.dtype),
        grid_spec=pltpu.PrefetchScalarGridSpec(
            num_scalar_prefetch=0,
            grid=(Np // tile_n,),
            in_specs=[
                pl.BlockSpec((tile_n, Hp), lambda i: (i, 0)),  # x rows (pipelined)
                pl.BlockSpec((Hp, Hp), lambda i: (0, 0)),      # weight (constant idx)
                pl.BlockSpec((1, Hp), lambda i: (0, 0)),       # bias
                pl.BlockSpec((1, Hp), lambda i: (0, 0)),       # gamma
                pl.BlockSpec((1, Hp), lambda i: (0, 0)),       # beta
            ],
            out_specs=pl.BlockSpec((tile_n, Hp), lambda i: (i, 0)),
        ),
        compiler_params=pltpu.CompilerParams(
            dimension_semantics=("parallel",),
            vmem_limit_bytes=vmem_limit,
        ),
        cost_estimate=pl.CostEstimate(
            flops=2 * Np * Hp * Hp,
            transcendentals=Np * Hp,
            bytes_accessed=(2 * Np * Hp + Hp * Hp) * x_bytes + 3 * Hp * 4,
        ),
    )(x2, w_p, b2, g2, beta2)

    return out2[:N, :H].reshape(B, S, H)


def _reference(x, w, b, gamma, beta, eps=1e-12):
    x32 = x.astype(jnp.float32)
    w32 = w.astype(jnp.float32)
    y = jnp.einsum("bsh,oh->bso", x32, w32) + b.astype(jnp.float32)
    c = jnp.sqrt(2.0 / jnp.pi).astype(jnp.float32)
    y = 0.5 * y * (1.0 + jnp.tanh(c * (y + 0.044715 * y ** 3)))
    mean = jnp.mean(y, axis=-1, keepdims=True)
    var = jnp.mean((y - mean) ** 2, axis=-1, keepdims=True)
    yn = (y - mean) * jax.lax.rsqrt(var + eps)
    return yn * gamma.astype(jnp.float32) + beta.astype(jnp.float32)


if __name__ == "__main__":
    key = jax.random.PRNGKey(0)
    batch, seq, hidden = 2, 8, 32
    eps = 1e-12

    k_x, k_w, k_b, k_g, k_beta = jax.random.split(key, 5)
    x = jax.random.normal(k_x, (batch, seq, hidden), dtype=jnp.float32)
    # "Linear(hidden, hidden)" parameters in PyTorch layout [out, in].
    w = jax.random.normal(k_w, (hidden, hidden), dtype=jnp.float32) * 0.05
    b = jax.random.normal(k_b, (hidden,), dtype=jnp.float32) * 0.02
    gamma = 1.0 + 0.1 * jax.random.normal(k_g, (hidden,), dtype=jnp.float32)
    beta = 0.1 * jax.random.normal(k_beta, (hidden,), dtype=jnp.float32)

    # --- f32 path ---
    out = bert_prediction_head_transform(x, w, b, gamma, beta, eps=eps)
    out = jax.block_until_ready(out)
    ref = _reference(x, w, b, gamma, beta, eps=eps)
    assert out.shape == (batch, seq, hidden)
    assert jnp.allclose(out, ref, atol=2e-4, rtol=2e-4), "f32 mismatch vs reference"

    # --- bf16 path (native MXU dtype); compare against f32 math on the rounded inputs ---
    x_bf = x.astype(jnp.bfloat16)
    w_bf = w.astype(jnp.bfloat16)
    out_bf = bert_prediction_head_transform(x_bf, w_bf, b, gamma, beta, eps=eps)
    out_bf = jax.block_until_ready(out_bf)
    ref_bf = _reference(x_bf, w_bf, b, gamma, beta, eps=eps)
    assert jnp.allclose(out_bf.astype(jnp.float32), ref_bf, atol=2e-2, rtol=2e-2), \
        "bf16 mismatch vs reference"

    print("KERNEL_OK")
</pallas_src>

<mosaic_0001>
module attributes {stable_mosaic.version = 11 : i64} {
  func.func @_head_transform_kernel(%arg0: i32, %arg1: memref<16x128xf32, #tpu.memory_space<vmem>>, %arg2: memref<128x128xf32, #tpu.memory_space<vmem>>, %arg3: memref<1x128xf32, #tpu.memory_space<vmem>>, %arg4: memref<1x128xf32, #tpu.memory_space<vmem>>, %arg5: memref<1x128xf32, #tpu.memory_space<vmem>>, %arg6: memref<16x128xf32, #tpu.memory_space<vmem>>) attributes {dimension_semantics = [#tpu.dimension_semantics<parallel>], iteration_bounds = array<i64: 1>, scalar_prefetch = 0 : i64, scratch_operands = 0 : i64, tpu.core_type = #tpu.core_type<tc>, window_params = [{transform_indices = @transform_0, window_bounds = array<i64: 16, 128>}, {pipeline_mode = #tpu.pipeline_mode<synchronous>, transform_indices = @transform_1, window_bounds = array<i64: 128, 128>}, {pipeline_mode = #tpu.pipeline_mode<synchronous>, transform_indices = @transform_2, window_bounds = array<i64: 1, 128>}, {pipeline_mode = #tpu.pipeline_mode<synchronous>, transform_indices = @transform_3, window_bounds = array<i64: 1, 128>}, {pipeline_mode = #tpu.pipeline_mode<synchronous>, transform_indices = @transform_4, window_bounds = array<i64: 1, 128>}, {transform_indices = @transform_5, window_bounds = array<i64: 16, 128>}]} {
    %c0 = arith.constant 0 : index
    %c0_0 = arith.constant 0 : index
    %0 = vector.load %arg1[%c0, %c0_0] : memref<16x128xf32, #tpu.memory_space<vmem>>, vector<16x128xf32>
    %c0_1 = arith.constant 0 : index
    %c0_2 = arith.constant 0 : index
    %1 = vector.load %arg2[%c0_1, %c0_2] : memref<128x128xf32, #tpu.memory_space<vmem>>, vector<128x128xf32>
    %cst = arith.constant dense<0.000000e+00> : vector<16x128xf32>
    %2 = tpu.matmul %0, %1, %cst {dimension_numbers = #tpu.dot_dimension_numbers<[1], [1], [0], [0], [0, 0, 1, 0], [], []>} : vector<16x128xf32>, vector<128x128xf32>, vector<16x128xf32> -> vector<16x128xf32>
    %c0_3 = arith.constant 0 : index
    %c0_4 = arith.constant 0 : index
    %3 = vector.load %arg3[%c0_3, %c0_4] : memref<1x128xf32, #tpu.memory_space<vmem>>, vector<1x128xf32>
    %4 = vector.broadcast %3 : vector<1x128xf32> to vector<16x128xf32>
    %5 = arith.addf %2, %4 : vector<16x128xf32>
    %cst_5 = arith.constant 5.000000e-01 : f32
    %6 = vector.broadcast %cst_5 : f32 to vector<16x128xf32>
    %7 = arith.mulf %6, %5 : vector<16x128xf32>
    %cst_6 = arith.constant 4.471500e-02 : f32
    %8 = vector.broadcast %cst_6 : f32 to vector<16x128xf32>
    %9 = arith.mulf %8, %5 : vector<16x128xf32>
    %10 = arith.mulf %9, %5 : vector<16x128xf32>
    %11 = arith.mulf %10, %5 : vector<16x128xf32>
    %12 = arith.addf %5, %11 : vector<16x128xf32>
    %cst_7 = arith.constant 0.797884583 : f32
    %13 = vector.broadcast %cst_7 : f32 to vector<16x128xf32>
    %14 = arith.mulf %13, %12 : vector<16x128xf32>
    %15 = math.tanh %14 : vector<16x128xf32>
    %cst_8 = arith.constant 1.000000e+00 : f32
    %16 = vector.broadcast %cst_8 : f32 to vector<16x128xf32>
    %17 = arith.addf %16, %15 : vector<16x128xf32>
    %18 = arith.mulf %7, %17 : vector<16x128xf32>
    %cst_9 = arith.constant dense<0.000000e+00> : vector<16xf32>
    %19 = vector.multi_reduction <add>, %18, %cst_9 [1] : vector<16x128xf32> to vector<16xf32>
    %20 = vector.shape_cast %19 : vector<16xf32> to vector<16x1xf32>
    %cst_10 = arith.constant 3.125000e-02 : f32
    %21 = vector.broadcast %cst_10 : f32 to vector<16x1xf32>
    %22 = arith.mulf %20, %21 : vector<16x1xf32>
    %23 = arith.mulf %18, %18 : vector<16x128xf32>
    %cst_11 = arith.constant dense<0.000000e+00> : vector<16xf32>
    %24 = vector.multi_reduction <add>, %23, %cst_11 [1] : vector<16x128xf32> to vector<16xf32>
    %25 = vector.shape_cast %24 : vector<16xf32> to vector<16x1xf32>
    %cst_12 = arith.constant 3.125000e-02 : f32
    %26 = vector.broadcast %cst_12 : f32 to vector<16x1xf32>
    %27 = arith.mulf %25, %26 : vector<16x1xf32>
    %28 = arith.mulf %22, %22 : vector<16x1xf32>
    %29 = arith.subf %27, %28 : vector<16x1xf32>
    %30 = vector.broadcast %22 : vector<16x1xf32> to vector<16x128xf32>
    %31 = arith.subf %18, %30 : vector<16x128xf32>
    %cst_13 = arith.constant 9.99999996E-13 : f32
    %32 = vector.broadcast %cst_13 : f32 to vector<16x1xf32>
    %33 = arith.addf %29, %32 : vector<16x1xf32>
    %34 = math.rsqrt %33 : vector<16x1xf32>
    %35 = vector.broadcast %34 : vector<16x1xf32> to vector<16x128xf32>
    %36 = arith.mulf %31, %35 : vector<16x128xf32>
    %c0_14 = arith.constant 0 : index
    %c0_15 = arith.constant 0 : index
    %37 = vector.load %arg4[%c0_14, %c0_15] : memref<1x128xf32, #tpu.memory_space<vmem>>, vector<1x128xf32>
    %38 = vector.broadcast %37 : vector<1x128xf32> to vector<16x128xf32>
    %39 = arith.mulf %36, %38 : vector<16x128xf32>
    %c0_16 = arith.constant 0 : index
    %c0_17 = arith.constant 0 : index
    %40 = vector.load %arg5[%c0_16, %c0_17] : memref<1x128xf32, #tpu.memory_space<vmem>>, vector<1x128xf32>
    %41 = vector.broadcast %40 : vector<1x128xf32> to vector<16x128xf32>
    %42 = arith.addf %39, %41 : vector<16x128xf32>
    %c0_18 = arith.constant 0 : index
    %c0_19 = arith.constant 0 : index
    %43 = vector.load %arg6[%c0_18, %c0_19] : memref<16x128xf32, #tpu.memory_space<vmem>>, vector<16x128xf32>
    tpu.vector_store %arg6[%c0_18, %c0_19], %42 {strides = array<i32>} : memref<16x128xf32, #tpu.memory_space<vmem>>, vector<16x128xf32>,
    return
  }
  func.func @transform_0(%arg0: i32) -> (i32, i32) {
    %c0_i32 = arith.constant 0 : i32
    %c0_i32_0 = arith.constant 0 : i32
    return %arg0, %c0_i32 : i32, i32
  }
  func.func @transform_1(%arg0: i32) -> (i32, i32) {
    %c0_i32 = arith.constant 0 : i32
    %c0_i32_0 = arith.constant 0 : i32
    %c0_i32_1 = arith.constant 0 : i32
    return %c0_i32, %c0_i32_0 : i32, i32
  }
  func.func @transform_2(%arg0: i32) -> (i32, i32) {
    %c0_i32 = arith.constant 0 : i32
    %c0_i32_0 = arith.constant 0 : i32
    %c0_i32_1 = arith.constant 0 : i32
    return %c0_i32, %c0_i32_0 : i32, i32
  }
  func.func @transform_3(%arg0: i32) -> (i32, i32) {
    %c0_i32 = arith.constant 0 : i32
    %c0_i32_0 = arith.constant 0 : i32
    %c0_i32_1 = arith.constant 0 : i32
    return %c0_i32, %c0_i32_0 : i32, i32
  }
  func.func @transform_4(%arg0: i32) -> (i32, i32) {
    %c0_i32 = arith.constant 0 : i32
    %c0_i32_0 = arith.constant 0 : i32
    %c0_i32_1 = arith.constant 0 : i32
    return %c0_i32, %c0_i32_0 : i32, i32
  }
  func.func @transform_5(%arg0: i32) -> (i32, i32) {
    %c0_i32 = arith.constant 0 : i32
    %c0_i32_0 = arith.constant 0 : i32
    return %arg0, %c0_i32 : i32, i32
  }
}

</mosaic_0001>

<llo_original>
// kernel: tpu_custom_call.1
$region0: #{tpu_custom_call.1}
  #allocation0 [shape = 'u32[]', space=smem, size = 0x4, offset = 0x4, fixed_abs, tag = 'smem constant byte address 0x4 - core index']
  #allocation1 [shape = 'u32[72,128]{1,0:T(1,128)}', space=vmem, size = 0x9000, scoped, tag = 'internal scratch']
  %s0 = inlined_call_operand.hbm [shape: f32[16,128], index: 0, kind: input, shape index: {}]
  %s1 = inlined_call_operand.hbm [shape: f32[128,128], index: 1, kind: input, shape index: {}]
  %s2 = inlined_call_operand.vmem [shape: f32[1,128], index: 2, kind: input, shape index: {}]
  %s3 = inlined_call_operand.vmem [shape: f32[1,128], index: 3, kind: input, shape index: {}]
  %s4 = inlined_call_operand.vmem [shape: f32[1,128], index: 4, kind: input, shape index: {}]
  %s5 = inlined_call_operand.hbm [shape: f32[16,128], index: 5, kind: output, shape index: {}]
  %s6 = sld [smem:[#allocation0]]
  $region38: #{tpu_custom_call.1} parent=0
    _
  %s8 = ssub.s32 1, %s6
  %s9 = scalar_select 0, %s8, %s6
  $region1: #{tpu_custom_call.1} parent=0
    #allocation2 [shape = 'u8[8192]{0}', space=vmem, size = 0x2000, scoped, tag = 'input window, operand 0, single buffered']
    #allocation3 [shape = 's32[1]{0}', space=sflag, size = 0x4, scoped, tag = 'scoped memory for tpu_custom_call.1']
    #allocation4 [shape = 's32[1]{0}', space=sflag, size = 0x4, scoped, tag = 'scoped memory for tpu_custom_call.1']
    #allocation5 [shape = 'u8[65536]{0}', space=vmem, size = 0x10000, scoped, tag = 'input window, operand 1, single buffered']
    #allocation6 [shape = 's32[1]{0}', space=sflag, size = 0x4, scoped, tag = 'scoped memory for tpu_custom_call.1']
    #allocation7 [shape = 'u8[8192]{0}', space=vmem, size = 0x2000, scoped, tag = 'output window, operand 0, single buffered']
    %10 = vsyncpa [#allocation3], 0
    %11 = vsyncpa [#allocation6], 0
    %12 = vsyncpa [#allocation4], 0
    // Predicated region
    $region2: #{tpu_custom_call.1} parent=1 // pred_check
      _
    $region3: #{tpu_custom_call.1} parent=1 // pred_check_branch
      %14 = sbr.rel (0) target = $region5
    $region4: #{tpu_custom_call.1} parent=1 // pred_region
      %16 = vsyncadd [#allocation3], 0
      %s17 = sshll.u32 %s0, 4
      %s18 = int_to_ptr.hbm [resolvable:$true] %s17
      %s19 = sshll.u32 [#allocation2], 4
      %s20 = int_to_ptr.vmem [resolvable:$true] %s19
      %25 = dma.hbm_to_vmem [thread:$0]  %s18, 256, %s20, [#allocation3], 128, 128, 8
    $region5: #{tpu_custom_call.1} parent=1 // pred_fallthru
      _
    // Predicated region
    $region6: #{tpu_custom_call.1} parent=1 // pred_check
      _
    $region7: #{tpu_custom_call.1} parent=1 // pred_check_branch
      %27 = sbr.rel (0) target = $region9
    $region8: #{tpu_custom_call.1} parent=1 // pred_region
      %29 = vsyncadd [#allocation6], 0
      %s30 = sshll.u32 %s1, 4
      %s31 = int_to_ptr.hbm [resolvable:$true] %s30
      %s32 = sshll.u32 [#allocation5], 4
      %s33 = int_to_ptr.vmem [resolvable:$true] %s32
      %38 = dma.hbm_to_vmem [thread:$0]  %s31, 2048, %s33, [#allocation6], 128, 128, 8
    $region9: #{tpu_custom_call.1} parent=1 // pred_fallthru
      _
    // Predicated region
    $region10: #{tpu_custom_call.1} parent=1 // pred_check
      _
    $region11: #{tpu_custom_call.1} parent=1 // pred_check_branch
      %40 = sbr.rel (0) target = $region13
    $region12: #{tpu_custom_call.1} parent=1 // pred_region
      _
    $region13: #{tpu_custom_call.1} parent=1 // pred_fallthru
      _
    // Predicated region
    $region14: #{tpu_custom_call.1} parent=1 // pred_check
      _
    $region15: #{tpu_custom_call.1} parent=1 // pred_check_branch
      %42 = sbr.rel (0) target = $region17
    $region16: #{tpu_custom_call.1} parent=1 // pred_region
      _
    $region17: #{tpu_custom_call.1} parent=1 // pred_fallthru
      _
    // Predicated region
    $region18: #{tpu_custom_call.1} parent=1 // pred_check
      _
    $region19: #{tpu_custom_call.1} parent=1 // pred_check_branch
      %44 = sbr.rel (0) target = $region21
    $region20: #{tpu_custom_call.1} parent=1 // pred_region
      _
    $region21: #{tpu_custom_call.1} parent=1 // pred_fallthru
      _
    // Predicated region
    $region22: #{tpu_custom_call.1} parent=1 // pred_check
      _
    $region23: #{tpu_custom_call.1} parent=1 // pred_check_branch
      %46 = sbr.rel (0) target = $region25
    $region24: #{tpu_custom_call.1} parent=1 // pred_region
      %48 = dma.done [#allocation3], 256
    $region25: #{tpu_custom_call.1} parent=1 // pred_fallthru
      _
    // Predicated region
    $region26: #{tpu_custom_call.1} parent=1 // pred_check
      _
    $region27: #{tpu_custom_call.1} parent=1 // pred_check_branch
      %50 = sbr.rel (0) target = $region29
    $region28: #{tpu_custom_call.1} parent=1 // pred_region
      %52 = dma.done [#allocation6], 2048
    $region29: #{tpu_custom_call.1} parent=1 // pred_fallthru
      _
    %v53 = vld [vmem:[#allocation2] sm:$0xff]
    %v54 = vld [vmem:[#allocation2 + $0x8] sm:$0xff]
    %v55 = vld [vmem:[#allocation5] sm:$0xff]
    %v56 = vld [vmem:[#allocation5 + $0x8] sm:$0xff]
    %v57 = vld [vmem:[#allocation5 + $0x10] sm:$0xff]
    %v58 = vld [vmem:[#allocation5 + $0x18] sm:$0xff]
    %v59 = vld [vmem:[#allocation5 + $0x20] sm:$0xff]
    %v60 = vld [vmem:[#allocation5 + $0x28] sm:$0xff]
    %v61 = vld [vmem:[#allocation5 + $0x30] sm:$0xff]
    %v62 = vld [vmem:[#allocation5 + $0x38] sm:$0xff]
    %v63 = vld [vmem:[#allocation5 + $0x40] sm:$0xff]
    %v64 = vld [vmem:[#allocation5 + $0x48] sm:$0xff]
    %v65 = vld [vmem:[#allocation5 + $0x50] sm:$0xff]
    %v66 = vld [vmem:[#allocation5 + $0x58] sm:$0xff]
    %v67 = vld [vmem:[#allocation5 + $0x60] sm:$0xff]
    %v68 = vld [vmem:[#allocation5 + $0x68] sm:$0xff]
    %v69 = vld [vmem:[#allocation5 + $0x70] sm:$0xff]
    %v70 = vld [vmem:[#allocation5 + $0x78] sm:$0xff]
    %v71 = vld [vmem:[%s2] sm:$0x1]
    %v73 = vperm.slane %v71, 0
    %75 = vmatpush.xpose.msra.mxu0 %v70
    %76 = vmatpush.xpose.msra.mxu0 %v69
    %77 = vmatpush.xpose.msra.mxu0 %v68
    %78 = vmatpush.xpose.msra.mxu0 %v67
    %79 = vmatpush.xpose.msra.mxu0 %v66
    %80 = vmatpush.xpose.msra.mxu0 %v65
    %81 = vmatpush.xpose.msra.mxu0 %v64
    %82 = vmatpush.xpose.msra.mxu0 %v63
    %83 = vmatpush.xpose.msra.mxu0 %v62
    %84 = vmatpush.xpose.msra.mxu0 %v61
    %85 = vmatpush.xpose.msra.mxu0 %v60
    %86 = vmatpush.xpose.msra.mxu0 %v59
    %87 = vmatpush.xpose.msra.mxu0 %v58
    %88 = vmatpush.xpose.msra.mxu0 %v57
    %89 = vmatpush.xpose.msra.mxu0 %v56
    %90 = vmatpush.xpose.msra.mxu0 %v55
    %91 = vmatmul.f32.gmra.mxu0 %v53
    %v92 = vpop.f32.mrf.mxu0
    %v93 = vadd.f32 %v73, %v92
    %94 = vmatmul.f32.gmra.mxu0 %v54
    %v95 = vpop.f32.mrf.mxu0
    %v96 = vadd.f32 %v73, %v95
    %97 = vdwg.mxu0
    %v98 = vmul.f32 %v93, 0.5
    %v99 = vmul.f32 %v96, 0.5
    %v100 = vmul.f32 %v93, 0.044715
    %v101 = vmul.f32 %v96, 0.044715
    %v102 = vmul.f32 %v100, %v93
    %v103 = vmul.f32 %v101, %v96
    %v104 = vmul.f32 %v102, %v93
    %v105 = vmul.f32 %v103, %v96
    %v106 = vadd.f32 %v93, %v104
    %v107 = vadd.f32 %v96, %v105
    %v108 = vmul.f32 %v106, 0.7978846
    %v109 = vmul.f32 %v107, 0.7978846
    %v110 = vtanh.pop %v108
    %v111 = vtanh.pop %v109
    %v112 = vadd.f32 %v110, 1.0
    %v113 = vadd.f32 %v111, 1.0
    %v114 = vmul.f32 %v98, %v112
    %v115 = vmul.f32 %v99, %v113
    %116 = vadd.xlane.f32.xlu0 %v114
    %v117 = vpop.xlane.xlu0 %116
    %118 = vadd.xlane.f32.xlu0 %v115
    %v119 = vpop.xlane.xlu0 %118
    %v120 = vmul.f32 %v117, 0.03125
    %v121 = vmul.f32 %v119, 0.03125
    %v122 = vmul.f32 %v114, %v114
    %v123 = vmul.f32 %v115, %v115
    %124 = vadd.xlane.f32.xlu0 %v122
    %v125 = vpop.xlane.xlu0 %124
    %126 = vadd.xlane.f32.xlu0 %v123
    %v127 = vpop.xlane.xlu0 %126
    %v128 = vmul.f32 %v125, 0.03125
    %v129 = vmul.f32 %v127, 0.03125
    %v130 = vmul.f32 %v120, %v120
    %v131 = vmul.f32 %v121, %v121
    %v132 = vsub.f32 %v128, %v130
    %v133 = vsub.f32 %v129, %v131
    %v134 = vsub.f32 %v114, %v120
    %v135 = vsub.f32 %v115, %v121
    %v136 = vadd.f32 %v132, 1e-12
    %v137 = vadd.f32 %v133, 1e-12
    %v138 = vrsqrt.pop %v136
    %v139 = vmul.f32 %v138, %v136
    %v140 = vmul.f32 %v139, %v138
    %v141 = vmul.f32 0.5, %v140
    %v142 = vsub.f32 1.5, %v141
    %v143 = vmul.f32 %v138, %v142
    %vm144 = vweird.f32 %v136
    %vm145 = vweird.f32 %v138
    %vm146 = vmor %vm144, %vm145
    %v147 = vsel %vm146, %v138, %v143
    %v148 = vrsqrt.pop %v137
    %v149 = vmul.f32 %v148, %v137
    %v150 = vmul.f32 %v149, %v148
    %v151 = vmul.f32 0.5, %v150
    %v152 = vsub.f32 1.5, %v151
    %v153 = vmul.f32 %v148, %v152
    %vm154 = vweird.f32 %v137
    %vm155 = vweird.f32 %v148
    %vm156 = vmor %vm154, %vm155
    %v157 = vsel %vm156, %v148, %v153
    %v158 = vmul.f32 %v134, %v147
    %v159 = vmul.f32 %v135, %v157
    %v160 = vld [vmem:[%s3] sm:$0x1]
    %v162 = vperm.slane %v160, 0
    %v164 = vmul.f32 %v158, %v162
    %v165 = vmul.f32 %v159, %v162
    %v166 = vld [vmem:[%s4] sm:$0x1]
    %v168 = vperm.slane %v166, 0
    %v170 = vadd.f32 %v164, %v168
    %v171 = vadd.f32 %v165, %v168
    %172 = vst [vmem:[#allocation7] sm:$0xff] %v170
    %173 = vst [vmem:[#allocation7 + $0x8] sm:$0xff] %v171
    // Predicated region
    $region30: #{tpu_custom_call.1} parent=1 // pred_check
      _
    $region31: #{tpu_custom_call.1} parent=1 // pred_check_branch
      %175 = sbr.rel (0) target = $region33
    $region32: #{tpu_custom_call.1} parent=1 // pred_region
      %177 = vsyncadd [#allocation4], 0
      %s178 = sshll.u32 [#allocation7], 4
      %s179 = int_to_ptr.vmem [resolvable:$true] %s178
      %s180 = sshll.u32 %s5, 4
      %s181 = int_to_ptr.hbm [resolvable:$true] %s180
      %186 = dma.vmem_to_hbm [thread:$0]  %s179, 256, %s181, [#allocation4], 128, 128, 8
    $region33: #{tpu_custom_call.1} parent=1 // pred_fallthru
      _
    // Predicated region
    $region34: #{tpu_custom_call.1} parent=1 // pred_check
      _
    $region35: #{tpu_custom_call.1} parent=1 // pred_check_branch
      %188 = sbr.rel (0) target = $region37
    $region36: #{tpu_custom_call.1} parent=1 // pred_region
      %190 = dma.done [#allocation4], 256
    $region37: #{tpu_custom_call.1} parent=1 // pred_fallthru
      _
    %191 = vsyncpa [#allocation3], 1
    %192 = vsyncpa [#allocation6], 1
    %193 = vsyncpa [#allocation4], 1

</llo_original>
